<compile_context>
chip_gen: v7x
topology: tpu7x:2x2x1
jax: 0.10.0
libtpu: 0.0.40
codegen_flags: <defaults>
</compile_context>

<pallas_src>
import functools
import math

import jax
import jax.numpy as jnp
from jax.experimental import pallas as pl
from jax.experimental.pallas import tpu as pltpu

_LANES = 128
_TARGET_SLAB_ROWS = 4096                    # ~2 MiB output block
_VMEM_BUDGET_BYTES = 12 * 1024 * 1024       # conservative across v5e/v6e/v7x
_MIN_PAR_BLOCK_BYTES = 256 * 1024           # keep blocks >= this when splitting for 2 TCs
_VMEM_LIMIT_BYTES = 32 * 1024 * 1024        # raise scoped VMEM (safe on all gens)

_COMPILER_PARAMS = pltpu.CompilerParams(
    dimension_semantics=("parallel",),
    vmem_limit_bytes=_VMEM_LIMIT_BYTES,
)


def _rotary_slab_kernel(pattern_ref, posfrac_ref, out_ref, *, pos_per_block: int):
    """Lane-dense path.

    out_ref is a (TR, 128) tile of the flattened (S*dim/128, 128) row-major
    slab of the (S, dim) table.  pattern_ref[r, c] = inv_freq_dup[(r*128+c) % dim]
    and posfrac_ref[r, c] = (r*128+c) // dim are constant-index inputs, so the
    per-element work is one add + one multiply.  Positions are exact integers
    in f32 (valid up to 2^24, same as the f32 reference), so the final product
    matches the reference bitwise.
    """
    base = (pl.program_id(0) * pos_per_block).astype(jnp.float32)
    out_ref[...] = (base + posfrac_ref[...]) * pattern_ref[...]


def _rotary_rows_kernel(inv_freq_dup_ref, out_ref):
    """General path: out_ref is a (TS, dim) row tile of the (S, dim) table."""
    ts = out_ref.shape[0]
    row0 = (pl.program_id(0) * ts).astype(jnp.float32)
    pos = row0 + jax.lax.broadcasted_iota(jnp.float32, out_ref.shape, 0)
    out_ref[...] = pos * inv_freq_dup_ref[...]      # (1, dim) sublane broadcast


def _pick_slab_tile(slab_rows: int, period: int) -> int:
    """Row-tile for the slab path: multiple of lcm(8, period), VMEM-capped,
    and (for large tables) small enough to leave >= 8 grid steps for v7x."""
    unit = (8 * period) // math.gcd(8, period)          # lcm(8, period)
    # VMEM per slab row: out (x2 buffers) + 2 constant inputs (x2 buffers).
    target = min(_TARGET_SLAB_ROWS, _VMEM_BUDGET_BYTES // (6 * 4 * _LANES))
    min_par_rows = _MIN_PAR_BLOCK_BYTES // (4 * _LANES)
    if slab_rows // 8 >= min_par_rows:                   # enough work: keep >=8 steps
        target = min(target, slab_rows // 8)
    tr = max(unit, (target // unit) * unit)
    return slab_rows if tr >= slab_rows else tr


def _pick_rows_tile(seq_len: int, dim: int) -> int:
    """Row-tile for the general path: multiple of 8, VMEM-byte capped by dim."""
    if seq_len <= 8:
        return seq_len
    row_bytes = 4 * dim
    target = min(1024, max(8, _VMEM_BUDGET_BYTES // (2 * row_bytes)))
    min_par_rows = max(8, _MIN_PAR_BLOCK_BYTES // row_bytes)
    if seq_len // 8 >= min_par_rows:
        target = min(target, seq_len // 8)
    ts = max(8, (target // 8) * 8)
    return seq_len if ts >= seq_len else ts


def rotary_embedding(max_seq_len: int, dim: int) -> jnp.ndarray:
    """Returns the (max_seq_len, dim) float32 rotary frequency table."""
    assert dim % 2 == 0, "dim must be even"
    # Deterministic "buffer" construction, identical math to the nn.Module.
    inv_freq = 1.0 / (10000.0 ** (jnp.arange(0, dim, 2, dtype=jnp.float32) / dim))
    inv_freq_dup = jnp.concatenate([inv_freq, inv_freq], axis=-1)   # (dim,)

    total = max_seq_len * dim

    # ---- Lane-dense slab path: whole table flattened to (S*dim/128, 128). ----
    if total % _LANES == 0:
        slab_rows = total // _LANES
        period = dim // math.gcd(dim, _LANES)   # slab-row period of the pattern
        tr = _pick_slab_tile(slab_rows, period)
        grid = (slab_rows + tr - 1) // tr

        # Precompute the per-tile pattern / position-fraction once (tile-sized,
        # independent of S).  Valid for every tile because tr*128 % dim == 0
        # whenever grid > 1 (tr is a multiple of `period`).
        flat = jnp.arange(tr * _LANES, dtype=jnp.int32)
        posfrac = (flat // dim).astype(jnp.float32).reshape(tr, _LANES)
        pattern = jnp.take(inv_freq_dup, flat % dim).reshape(tr, _LANES)
        pos_per_block = (tr * _LANES) // dim

        out = pl.pallas_call(
            functools.partial(_rotary_slab_kernel, pos_per_block=pos_per_block),
            out_shape=jax.ShapeDtypeStruct((slab_rows, _LANES), jnp.float32),
            grid=(grid,),
            in_specs=[
                pl.BlockSpec((tr, _LANES), lambda i: (0, 0)),   # pattern (fetched once)
                pl.BlockSpec((tr, _LANES), lambda i: (0, 0)),   # posfrac (fetched once)
            ],
            out_specs=pl.BlockSpec((tr, _LANES), lambda i: (i, 0)),
            compiler_params=_COMPILER_PARAMS,
        )(pattern, posfrac)
        return out.reshape(max_seq_len, dim)

    # ---- General row-tiled path (shapes that cannot lane-pack). ----
    ts = _pick_rows_tile(max_seq_len, dim)
    grid = (max_seq_len + ts - 1) // ts
    out = pl.pallas_call(
        _rotary_rows_kernel,
        out_shape=jax.ShapeDtypeStruct((max_seq_len, dim), jnp.float32),
        grid=(grid,),
        in_specs=[pl.BlockSpec((1, dim), lambda i: (0, 0))],
        out_specs=pl.BlockSpec((ts, dim), lambda i: (i, 0)),
        compiler_params=_COMPILER_PARAMS,
    )(inv_freq_dup.reshape(1, dim))
    return out


def _reference(max_seq_len: int, dim: int) -> jnp.ndarray:
    inv_freq = 1.0 / (10000.0 ** (jnp.arange(0, dim, 2, dtype=jnp.float32) / dim))
    seq = jnp.arange(max_seq_len, dtype=jnp.float32)
    freqs = jnp.einsum("i,j->ij", seq, inv_freq)
    return jnp.concatenate([freqs, freqs], axis=-1)


if __name__ == "__main__":
    # Deterministic setup (module has no learned weights; key per convention).
    _ = jax.random.PRNGKey(0)

    # 1) Small shape from the spec: slab path, single block.
    out = rotary_embedding(8, 32)
    jax.block_until_ready(out)
    ref = _reference(8, 32)
    assert out.shape == (8, 32) and out.dtype == jnp.float32, (out.shape, out.dtype)
    assert jnp.allclose(out, ref, atol=1e-6, rtol=1e-6), "mismatch (slab, single block)"

    # 2) Slab path, multi-block grid (exercises per-tile base offset).
    out2 = rotary_embedding(2048, 256)
    jax.block_until_ready(out2)
    assert jnp.allclose(out2, _reference(2048, 256), atol=1e-5, rtol=1e-6), \
        "mismatch (slab, multi block)"

    # 3) Rows path, single small block (S*dim not a multiple of 128).
    out3 = rotary_embedding(7, 32)
    jax.block_until_ready(out3)
    assert jnp.allclose(out3, _reference(7, 32), atol=1e-6, rtol=1e-6), \
        "mismatch (rows, single block)"

    # 4) Rows path, multi-block with ragged last block.
    out4 = rotary_embedding(100, 24)
    jax.block_until_ready(out4)
    assert jnp.allclose(out4, _reference(100, 24), atol=1e-6, rtol=1e-6), \
        "mismatch (rows, ragged grid)"

    print("KERNEL_OK")
</pallas_src>

<mosaic_0001>
module attributes {stable_mosaic.version = 11 : i64} {
  func.func @_rotary_slab_kernel(%arg0: i32, %arg1: memref<2x128xf32, #tpu.memory_space<vmem>>, %arg2: memref<2x128xf32, #tpu.memory_space<vmem>>, %arg3: memref<2x128xf32, #tpu.memory_space<vmem>>) attributes {dimension_semantics = [#tpu.dimension_semantics<parallel>], iteration_bounds = array<i64: 1>, scalar_prefetch = 0 : i64, scratch_operands = 0 : i64, tpu.core_type = #tpu.core_type<tc>, window_params = [{pipeline_mode = #tpu.pipeline_mode<synchronous>, transform_indices = @transform_0, window_bounds = array<i64: 2, 128>}, {pipeline_mode = #tpu.pipeline_mode<synchronous>, transform_indices = @transform_1, window_bounds = array<i64: 2, 128>}, {transform_indices = @transform_2, window_bounds = array<i64: 2, 128>}]} {
    %c8_i32 = arith.constant 8 : i32
    %0 = arith.muli %arg0, %c8_i32 : i32
    %1 = arith.sitofp %0 : i32 to f32
    %c0 = arith.constant 0 : index
    %c0_0 = arith.constant 0 : index
    %2 = vector.load %arg2[%c0, %c0_0] : memref<2x128xf32, #tpu.memory_space<vmem>>, vector<2x128xf32>
    %3 = vector.broadcast %1 : f32 to vector<2x128xf32>
    %4 = arith.addf %3, %2 : vector<2x128xf32>
    %c0_1 = arith.constant 0 : index
    %c0_2 = arith.constant 0 : index
    %5 = vector.load %arg1[%c0_1, %c0_2] : memref<2x128xf32, #tpu.memory_space<vmem>>, vector<2x128xf32>
    %6 = arith.mulf %4, %5 : vector<2x128xf32>
    %c0_3 = arith.constant 0 : index
    %c0_4 = arith.constant 0 : index
    %7 = vector.load %arg3[%c0_3, %c0_4] : memref<2x128xf32, #tpu.memory_space<vmem>>, vector<2x128xf32>
    tpu.vector_store %arg3[%c0_3, %c0_4], %6 {strides = array<i32>} : memref<2x128xf32, #tpu.memory_space<vmem>>, vector<2x128xf32>,
    return
  }
  func.func @transform_0(%arg0: i32) -> (i32, i32) {
    %c0_i32 = arith.constant 0 : i32
    %c0_i32_0 = arith.constant 0 : i32
    %c0_i32_1 = arith.constant 0 : i32
    return %c0_i32, %c0_i32_0 : i32, i32
  }
  func.func @transform_1(%arg0: i32) -> (i32, i32) {
    %c0_i32 = arith.constant 0 : i32
    %c0_i32_0 = arith.constant 0 : i32
    %c0_i32_1 = arith.constant 0 : i32
    return %c0_i32, %c0_i32_0 : i32, i32
  }
  func.func @transform_2(%arg0: i32) -> (i32, i32) {
    %c0_i32 = arith.constant 0 : i32
    %c0_i32_0 = arith.constant 0 : i32
    return %arg0, %c0_i32 : i32, i32
  }
}

</mosaic_0001>

<llo_original>
// kernel: tpu_custom_call.1
$region0: #{tpu_custom_call.1}
  #allocation0 [shape = 'u32[]', space=smem, size = 0x4, offset = 0x4, fixed_abs, tag = 'smem constant byte address 0x4 - core index']
  #allocation1 [shape = 'u32[144,128]{1,0:T(1,128)}', space=vmem, size = 0x12000, scoped, tag = 'internal scratch']
  %s0 = inlined_call_operand.hbm [shape: f32[2,128], index: 0, kind: input, shape index: {}]
  %s1 = inlined_call_operand.vmem [shape: f32[2,128], index: 1, kind: input, shape index: {}]
  %s2 = inlined_call_operand.hbm [shape: f32[2,128], index: 2, kind: output, shape index: {}]
  %s3 = sld [smem:[#allocation0]]
  $region22: #{tpu_custom_call.1} parent=0
    _
  %s5 = ssub.s32 1, %s3
  %s6 = scalar_select 0, %s5, %s3
  $region1: #{tpu_custom_call.1} parent=0
    #allocation2 [shape = 'u8[1024]{0}', space=vmem, size = 0x400, scoped, tag = 'input window, operand 0, single buffered']
    #allocation3 [shape = 's32[1]{0}', space=sflag, size = 0x4, scoped, tag = 'scoped memory for tpu_custom_call.1']
    #allocation4 [shape = 's32[1]{0}', space=sflag, size = 0x4, scoped, tag = 'scoped memory for tpu_custom_call.1']
    #allocation5 [shape = 'u8[1024]{0}', space=vmem, size = 0x400, scoped, tag = 'output window, operand 0, single buffered']
    %7 = vsyncpa [#allocation3], 0
    %8 = vsyncpa [#allocation4], 0
    // Predicated region
    $region2: #{tpu_custom_call.1} parent=1 // pred_check
      _
    $region3: #{tpu_custom_call.1} parent=1 // pred_check_branch
      %10 = sbr.rel (0) target = $region5
    $region4: #{tpu_custom_call.1} parent=1 // pred_region
      %s12 = ssub.s32 32, 32
      %13 = vsyncadd [#allocation3], %s12
      %s15 = sshll.u32 [#allocation2], 4
      %s16 = int_to_ptr.vmem [resolvable:$true] %s15
      %18 = dma.hbm_to_vmem [thread:$0]  %s0, 32, %s16, [#allocation3]
    $region5: #{tpu_custom_call.1} parent=1 // pred_fallthru
      _
    // Predicated region
    $region6: #{tpu_custom_call.1} parent=1 // pred_check
      _
    $region7: #{tpu_custom_call.1} parent=1 // pred_check_branch
      %20 = sbr.rel (0) target = $region9
    $region8: #{tpu_custom_call.1} parent=1 // pred_region
      _
    $region9: #{tpu_custom_call.1} parent=1 // pred_fallthru
      _
    // Predicated region
    $region10: #{tpu_custom_call.1} parent=1 // pred_check
      _
    $region11: #{tpu_custom_call.1} parent=1 // pred_check_branch
      %22 = sbr.rel (0) target = $region13
    $region12: #{tpu_custom_call.1} parent=1 // pred_region
      %23 = dma.done [#allocation3], 32
    $region13: #{tpu_custom_call.1} parent=1 // pred_fallthru
      _
    %s24 = smul.u32 0, 8
    %s25 = scvt.s32.f32 %s24
    %v26 = vld [vmem:[%s1] sm:$0x3]
    %v27 = vstv %s25
    %v28 = vadd.f32 %v27, %v26
    %v29 = vld [vmem:[#allocation2] sm:$0x3]
    %v30 = vmul.f32 %v28, %v29
    %31 = vst [vmem:[#allocation5] sm:$0x3] %v30
    // Predicated region
    $region14: #{tpu_custom_call.1} parent=1 // pred_check
      _
    $region15: #{tpu_custom_call.1} parent=1 // pred_check_branch
      %33 = sbr.rel (0) target = $region17
    $region16: #{tpu_custom_call.1} parent=1 // pred_region
      %s35 = ssub.s32 32, 32
      %36 = vsyncadd [#allocation4], %s35
      %s38 = sshll.u32 [#allocation5], 4
      %s39 = int_to_ptr.vmem [resolvable:$true] %s38
      %41 = dma.vmem_to_hbm [thread:$0]  %s39, 32, %s2, [#allocation4]
    $region17: #{tpu_custom_call.1} parent=1 // pred_fallthru
      _
    // Predicated region
    $region18: #{tpu_custom_call.1} parent=1 // pred_check
      _
    $region19: #{tpu_custom_call.1} parent=1 // pred_check_branch
      %43 = sbr.rel (0) target = $region21
    $region20: #{tpu_custom_call.1} parent=1 // pred_region
      %44 = dma.done [#allocation4], 32
    $region21: #{tpu_custom_call.1} parent=1 // pred_fallthru
      _
    %45 = vsyncpa [#allocation3], 1
    %46 = vsyncpa [#allocation4], 1

</llo_original>
